<compile_context>
chip_gen: v7x
topology: tpu7x:2x2x1
jax: 0.10.0
libtpu: 0.0.40
codegen_flags: <defaults>
</compile_context>

<pallas_src>
import jax
import jax.numpy as jnp
from jax.experimental import pallas as pl
from jax.experimental.pallas import tpu as pltpu


def _ltv_kernel(x_ref, h_out_ref, w_out_ref, carry_ref):
    """Accumulate squared width / height differences for one row band."""
    i = pl.program_id(0)

    @pl.when(i == 0)
    def _init():
        h_out_ref[...] = jnp.zeros_like(h_out_ref)
        w_out_ref[...] = jnp.zeros_like(w_out_ref)
        carry_ref[...] = jnp.zeros_like(carry_ref)

    x = x_ref[...].astype(jnp.float32)                 # (band_rows, W)

    # Width-direction (lane) differences, fully inside the band.
    dw = x[:, 1:] - x[:, :-1]
    w_out_ref[...] += jnp.sum(dw * dw)

    # Height-direction (sublane) differences inside the band.
    dh = x[1:, :] - x[:-1, :]
    h_sq = jnp.sum(dh * dh)

    # Cross-band pair: carried last row of previous band vs first row here.
    db = x[0:1, :] - carry_ref[...]
    boundary = jnp.where(i > 0, jnp.sum(db * db), jnp.float32(0.0))
    h_out_ref[...] += h_sq + boundary

    # Carry the last row of this band forward for the next grid step.
    carry_ref[...] = x[-1:, :]


def _pick_band_rows(h, w, itemsize, target_bytes=4 * 1024 * 1024):
    divisors = [d for d in range(8, h + 1, 8) if h % d == 0]
    if not divisors:
        return h  # single full-height band (block == full dim is always legal)
    fitting = [d for d in divisors if d * w * itemsize <= target_bytes]
    return max(fitting) if fitting else min(divisors)


def l_tv(x, tv_weight=1.0, band_rows=None):
    """Total-variation loss of a 2-D array x (H, W). Returns an f32 scalar."""
    h, w = x.shape
    assert h >= 2 and w >= 2, "L_TV needs H >= 2 and W >= 2"

    itemsize = jnp.dtype(x.dtype).itemsize
    if band_rows is None:
        band_rows = _pick_band_rows(h, w, itemsize)
    if h % band_rows != 0 or (band_rows % 8 != 0 and band_rows != h):
        band_rows = h  # fallback: one band covering the whole image
    n_bands = h // band_rows

    band_bytes = band_rows * w * itemsize
    vmem_limit = int(min(48 * 1024 * 1024,
                         max(16 * 1024 * 1024, 4 * band_bytes + (2 << 20))))

    cost = pl.CostEstimate(
        flops=6 * h * w,
        transcendentals=0,
        bytes_accessed=h * w * itemsize + 8,
    )

    h_sum, w_sum = pl.pallas_call(
        _ltv_kernel,
        out_shape=(jax.ShapeDtypeStruct((1, 1), jnp.float32),
                   jax.ShapeDtypeStruct((1, 1), jnp.float32)),
        grid_spec=pltpu.PrefetchScalarGridSpec(
            num_scalar_prefetch=0,
            grid=(n_bands,),
            in_specs=[pl.BlockSpec((band_rows, w), lambda i: (i, 0))],
            out_specs=[pl.BlockSpec((1, 1), lambda i: (0, 0)),
                       pl.BlockSpec((1, 1), lambda i: (0, 0))],
            scratch_shapes=[pltpu.VMEM((1, w), jnp.float32)],
        ),
        compiler_params=pltpu.CompilerParams(
            dimension_semantics=("arbitrary",),
            vmem_limit_bytes=vmem_limit,
        ),
        cost_estimate=cost,
    )(x)

    count_h = (h - 1) * w
    count_w = h * (w - 1)
    return (jnp.float32(tv_weight) * 2.0
            * (h_sum[0, 0] / jnp.float32(count_h)
               + w_sum[0, 0] / jnp.float32(count_w)))


def _reference(x, tv_weight=1.0):
    h, w = x.shape
    xf = x.astype(jnp.float32)
    h_tv = jnp.sum((xf[1:, :] - xf[:-1, :]) ** 2)
    w_tv = jnp.sum((xf[:, 1:] - xf[:, :-1]) ** 2)
    return tv_weight * 2.0 * (h_tv / ((h - 1) * w) + w_tv / (h * (w - 1)))


if __name__ == "__main__":
    key = jax.random.PRNGKey(0)
    # Small 2-D input consistent with the module's (H, W) forward.
    x = jax.random.uniform(key, (64, 128), dtype=jnp.float32)

    # Multi-band run (band_rows=16 -> 4 bands) exercising the cross-band carry.
    out_multi = jax.block_until_ready(l_tv(x, tv_weight=1.0, band_rows=16))
    # Default band selection (single band for this small shape).
    out_auto = jax.block_until_ready(l_tv(x, tv_weight=1.0))

    ref = _reference(x, 1.0)
    assert jnp.allclose(out_multi, ref, atol=1e-5, rtol=1e-5), (out_multi, ref)
    assert jnp.allclose(out_auto, ref, atol=1e-5, rtol=1e-5), (out_auto, ref)

    print("KERNEL_OK")
</pallas_src>

<mosaic_0001>
module attributes {stable_mosaic.version = 11 : i64} {
  func.func @_ltv_kernel(%arg0: i32, %arg1: memref<16x128xf32, #tpu.memory_space<vmem>>, %arg2: memref<1x1xf32, #tpu.memory_space<vmem>>, %arg3: memref<1x1xf32, #tpu.memory_space<vmem>>, %arg4: memref<1x128xf32, #tpu.memory_space<vmem>>) attributes {dimension_semantics = [#tpu.dimension_semantics<arbitrary>], iteration_bounds = array<i64: 4>, scalar_prefetch = 0 : i64, scratch_operands = 1 : i64, tpu.core_type = #tpu.core_type<tc>, window_params = [{transform_indices = @transform_0, window_bounds = array<i64: 16, 128>}, {pipeline_mode = #tpu.pipeline_mode<synchronous>, transform_indices = @transform_1, window_bounds = array<i64: 1, 1>}, {pipeline_mode = #tpu.pipeline_mode<synchronous>, transform_indices = @transform_2, window_bounds = array<i64: 1, 1>}]} {
    %c0_i32 = arith.constant 0 : i32
    %0 = arith.cmpi eq, %arg0, %c0_i32 : i32
    %1 = arith.extui %0 : i1 to i32
    %c0_i32_0 = arith.constant 0 : i32
    %2 = arith.cmpi ne, %1, %c0_i32_0 : i32
    scf.if %2 {
      %cst_18 = arith.constant 0.000000e+00 : f32
      %41 = vector.broadcast %cst_18 : f32 to vector<1x1xf32>
      %c0_19 = arith.constant 0 : index
      %c0_20 = arith.constant 0 : index
      %42 = vector.load %arg2[%c0_19, %c0_20] : memref<1x1xf32, #tpu.memory_space<vmem>>, vector<1x1xf32>
      tpu.vector_store %arg2[%c0_19, %c0_20], %41 {strides = array<i32>} : memref<1x1xf32, #tpu.memory_space<vmem>>, vector<1x1xf32>,
      %cst_21 = arith.constant 0.000000e+00 : f32
      %43 = vector.broadcast %cst_21 : f32 to vector<1x1xf32>
      %c0_22 = arith.constant 0 : index
      %c0_23 = arith.constant 0 : index
      %44 = vector.load %arg3[%c0_22, %c0_23] : memref<1x1xf32, #tpu.memory_space<vmem>>, vector<1x1xf32>
      tpu.vector_store %arg3[%c0_22, %c0_23], %43 {strides = array<i32>} : memref<1x1xf32, #tpu.memory_space<vmem>>, vector<1x1xf32>,
      %cst_24 = arith.constant 0.000000e+00 : f32
      %45 = vector.broadcast %cst_24 : f32 to vector<1x128xf32>
      %c0_25 = arith.constant 0 : index
      %c0_26 = arith.constant 0 : index
      %46 = vector.load %arg4[%c0_25, %c0_26] : memref<1x128xf32, #tpu.memory_space<vmem>>, vector<1x128xf32>
      tpu.vector_store %arg4[%c0_25, %c0_26], %45 {strides = array<i32>} : memref<1x128xf32, #tpu.memory_space<vmem>>, vector<1x128xf32>,
    } else {
    }
    %c0 = arith.constant 0 : index
    %c0_1 = arith.constant 0 : index
    %3 = vector.load %arg1[%c0, %c0_1] : memref<16x128xf32, #tpu.memory_space<vmem>>, vector<16x128xf32>
    %4 = vector.extract_strided_slice %3 {offsets = [0, 1], sizes = [16, 127], strides = [1, 1]} : vector<16x128xf32> to vector<16x127xf32>
    %5 = vector.extract_strided_slice %3 {offsets = [0, 0], sizes = [16, 127], strides = [1, 1]} : vector<16x128xf32> to vector<16x127xf32>
    %6 = arith.subf %4, %5 : vector<16x127xf32>
    %c0_2 = arith.constant 0 : index
    %c0_3 = arith.constant 0 : index
    %7 = vector.load %arg3[%c0_2, %c0_3] : memref<1x1xf32, #tpu.memory_space<vmem>>, vector<1x1xf32>
    %8 = arith.mulf %6, %6 : vector<16x127xf32>
    %9 = vector.shape_cast %8 : vector<16x127xf32> to vector<1x16x127xf32>
    %cst = arith.constant dense<0.000000e+00> : vector<1xf32>
    %10 = vector.multi_reduction <add>, %9, %cst [1, 2] : vector<1x16x127xf32> to vector<1xf32>
    %11 = vector.shape_cast %10 : vector<1xf32> to vector<1x1x1xf32>
    %12 = vector.extract %11[0, 0, 0] : f32 from vector<1x1x1xf32>
    %13 = vector.broadcast %12 : f32 to vector<1x1xf32>
    %14 = arith.addf %7, %13 : vector<1x1xf32>
    %c0_4 = arith.constant 0 : index
    %c0_5 = arith.constant 0 : index
    %15 = vector.load %arg3[%c0_4, %c0_5] : memref<1x1xf32, #tpu.memory_space<vmem>>, vector<1x1xf32>
    tpu.vector_store %arg3[%c0_4, %c0_5], %14 {strides = array<i32>} : memref<1x1xf32, #tpu.memory_space<vmem>>, vector<1x1xf32>,
    %16 = vector.extract_strided_slice %3 {offsets = [1, 0], sizes = [15, 128], strides = [1, 1]} : vector<16x128xf32> to vector<15x128xf32>
    %17 = vector.extract_strided_slice %3 {offsets = [0, 0], sizes = [15, 128], strides = [1, 1]} : vector<16x128xf32> to vector<15x128xf32>
    %18 = arith.subf %16, %17 : vector<15x128xf32>
    %19 = arith.mulf %18, %18 : vector<15x128xf32>
    %20 = vector.shape_cast %19 : vector<15x128xf32> to vector<1x15x128xf32>
    %cst_6 = arith.constant dense<0.000000e+00> : vector<1xf32>
    %21 = vector.multi_reduction <add>, %20, %cst_6 [1, 2] : vector<1x15x128xf32> to vector<1xf32>
    %22 = vector.shape_cast %21 : vector<1xf32> to vector<1x1x1xf32>
    %23 = vector.extract %22[0, 0, 0] : f32 from vector<1x1x1xf32>
    %24 = vector.extract_strided_slice %3 {offsets = [0, 0], sizes = [1, 128], strides = [1, 1]} : vector<16x128xf32> to vector<1x128xf32>
    %c0_7 = arith.constant 0 : index
    %c0_8 = arith.constant 0 : index
    %25 = vector.load %arg4[%c0_7, %c0_8] : memref<1x128xf32, #tpu.memory_space<vmem>>, vector<1x128xf32>
    %26 = arith.subf %24, %25 : vector<1x128xf32>
    %c0_i32_9 = arith.constant 0 : i32
    %27 = arith.cmpi sgt, %arg0, %c0_i32_9 : i32
    %28 = arith.mulf %26, %26 : vector<1x128xf32>
    %29 = vector.shape_cast %28 : vector<1x128xf32> to vector<1x1x128xf32>
    %cst_10 = arith.constant dense<0.000000e+00> : vector<1xf32>
    %30 = vector.multi_reduction <add>, %29, %cst_10 [1, 2] : vector<1x1x128xf32> to vector<1xf32>
    %31 = vector.shape_cast %30 : vector<1xf32> to vector<1x1x1xf32>
    %32 = vector.extract %31[0, 0, 0] : f32 from vector<1x1x1xf32>
    %cst_11 = arith.constant 0.000000e+00 : f32
    %33 = arith.select %27, %32, %cst_11 : f32
    %c0_12 = arith.constant 0 : index
    %c0_13 = arith.constant 0 : index
    %34 = vector.load %arg2[%c0_12, %c0_13] : memref<1x1xf32, #tpu.memory_space<vmem>>, vector<1x1xf32>
    %35 = arith.addf %23, %33 : f32
    %36 = vector.broadcast %35 : f32 to vector<1x1xf32>
    %37 = arith.addf %34, %36 : vector<1x1xf32>
    %c0_14 = arith.constant 0 : index
    %c0_15 = arith.constant 0 : index
    %38 = vector.load %arg2[%c0_14, %c0_15] : memref<1x1xf32, #tpu.memory_space<vmem>>, vector<1x1xf32>
    tpu.vector_store %arg2[%c0_14, %c0_15], %37 {strides = array<i32>} : memref<1x1xf32, #tpu.memory_space<vmem>>, vector<1x1xf32>,
    %39 = vector.extract_strided_slice %3 {offsets = [15, 0], sizes = [1, 128], strides = [1, 1]} : vector<16x128xf32> to vector<1x128xf32>
    %c0_16 = arith.constant 0 : index
    %c0_17 = arith.constant 0 : index
    %40 = vector.load %arg4[%c0_16, %c0_17] : memref<1x128xf32, #tpu.memory_space<vmem>>, vector<1x128xf32>
    tpu.vector_store %arg4[%c0_16, %c0_17], %39 {strides = array<i32>} : memref<1x128xf32, #tpu.memory_space<vmem>>, vector<1x128xf32>,
    return
  }
  func.func @transform_0(%arg0: i32) -> (i32, i32) {
    %c0_i32 = arith.constant 0 : i32
    %c0_i32_0 = arith.constant 0 : i32
    return %arg0, %c0_i32 : i32, i32
  }
  func.func @transform_1(%arg0: i32) -> (i32, i32) {
    %c0_i32 = arith.constant 0 : i32
    %c0_i32_0 = arith.constant 0 : i32
    %c0_i32_1 = arith.constant 0 : i32
    return %c0_i32, %c0_i32_0 : i32, i32
  }
  func.func @transform_2(%arg0: i32) -> (i32, i32) {
    %c0_i32 = arith.constant 0 : i32
    %c0_i32_0 = arith.constant 0 : i32
    %c0_i32_1 = arith.constant 0 : i32
    return %c0_i32, %c0_i32_0 : i32, i32
  }
}

</mosaic_0001>

<llo_original>
// kernel: tpu_custom_call.1
$region0: #{tpu_custom_call.1}
  #allocation0 [shape = 'u32[]', space=smem, size = 0x4, offset = 0x4, fixed_abs, tag = 'smem constant byte address 0x4 - core index']
  #allocation1 [shape = 'u32[144,128]{1,0:T(1,128)}', space=vmem, size = 0x12000, scoped, tag = 'internal scratch']
  #allocation2 [shape = 'f32[1,128]{1,0:T(1,128)}', space=vmem, size = 0x200, scoped, tag = 'scratch operand']
  %s0 = inlined_call_operand.hbm [shape: f32[64,128], index: 0, kind: input, shape index: {}]
  %s1 = inlined_call_operand.hbm [shape: f32[1,1], index: 1, kind: output, shape index: {0}]
  %s2 = inlined_call_operand.hbm [shape: f32[1,1], index: 2, kind: output, shape index: {1}]
  %3 = xla_tuple %s1, %s2
  %s4 = sld [smem:[#allocation0]]
  $region53: #{tpu_custom_call.1} parent=0
    _
  %s6 = ssub.s32 1, %s4
  %s7 = scalar_select 0, %s6, %s4
  $region1: #{tpu_custom_call.1} parent=0
    #allocation3 [shape = 'u8[16384]{0}', space=vmem, size = 0x4000, scoped, tag = 'input window, operand 0']
    #allocation4 [shape = 's32[2]{0}', space=sflag, size = 0x8, scoped, tag = 'scoped memory for tpu_custom_call.1']
    #allocation5 [shape = 's32[2]{0}', space=sflag, size = 0x8, scoped, tag = 'scoped memory for tpu_custom_call.1']
    #allocation6 [shape = 'u8[512]{0}', space=vmem, size = 0x400, scoped, tag = 'output window, operand 0, single buffered']
    #allocation7 [shape = 'u8[512]{0}', space=vmem, size = 0x400, scoped, tag = 'output window, operand 1, single buffered']
    #allocation8 [shape = 's32[1]{0}', space=sflag, size = 0x4, scoped, tag = 'scoped memory for tpu_custom_call.1']
    %8 = vsyncpa [#allocation4], 0
    %s9 = scalar_lea.sflag [#allocation4], 1
    %10 = vsyncpa %s9, 0
    %11 = vsyncpa [#allocation5], 0
    %12 = vsyncpa [#allocation8], 0
    loop: start=0, step=1, limit=6
    $region2: #{tpu_custom_call.1} parent=1 // loop_pre_header
      _
    $region3: #{tpu_custom_call.1} parent=1 // loop_header
      %s14 = sphi 0, %s18
      %p15 = scmp.ge.s32.totalorder %s14, 6
      %s24 = sphi 0, %s26
      %s27 = sphi 0, %s24
      %s28 = sphi 0, %s27
      %s44 = sphi 0, %s28
      %s48 = sphi 0, %s48
      %s50 = sphi 0, %s48
      %s51 = sphi 0, %s50
      %s65 = sphi 0, %s51
      %s69 = sphi 0, %s69
      %s71 = sphi 0, %s69
      %s72 = sphi 0, %s71
      %s86 = sphi 0, %s72
    $region4: #{tpu_custom_call.1} parent=1 // loop_header_branch
      %17 = sbr.rel (%p15) target = $region8
    $region5: #{tpu_custom_call.1} parent=1 // loop_body
      %s19 = ssub.s32 %s14, 1
      %s20 = ssub.s32 %s14, 2
      %s21 = sadd.s32 %s14, 1
      %s22 = ssub.s32 %s14, %s21
      %p23 = scmp.eq.s32.totalorder %s22, 0
      %s25 = sadd.s32 %s24, 1
      %s26 = scalar_select %p23, %s24, %s25
      %p29 = pneg %p23
      %p30 = scmp.eq.s32.totalorder %s14, 3
      %p31 = por %p29, %p30
      %p32 = scmp.ne.s32.totalorder %s24, %s27
      %p33 = scmp.eq.s32.totalorder %s14, 0
      %p34 = por %p32, %p33
      %p35 = scmp.ne.s32.totalorder %s24, %s27
      %p36 = scmp.eq.s32.totalorder %s19, 3
      %p37 = por %p35, %p36
      %p38 = scmp.ne.s32.totalorder %s27, %s28
      %p39 = scmp.eq.s32.totalorder %s19, 0
      %p40 = por %p38, %p39
      %p41 = scmp.ne.s32.totalorder %s27, %s28
      %p42 = scmp.eq.s32.totalorder %s20, 3
      %p43 = por %p41, %p42
      %p45 = scmp.ne.s32.totalorder %s28, %s44
      %p46 = scmp.eq.s32.totalorder %s20, 0
      %p47 = por %p45, %p46
      %s49 = sadd.s32 %s48, 1
      %p52 = scmp.eq.s32.totalorder %s14, 3
      %p53 = scmp.ne.s32.totalorder %s48, %s50
      %p54 = scmp.eq.s32.totalorder %s14, 0
      %p55 = por %p53, %p54
      %p56 = scmp.ne.s32.totalorder %s48, %s50
      %p57 = scmp.eq.s32.totalorder %s19, 3
      %p58 = por %p56, %p57
      %p59 = scmp.ne.s32.totalorder %s50, %s51
      %p60 = scmp.eq.s32.totalorder %s19, 0
      %p61 = por %p59, %p60
      %p62 = scmp.ne.s32.totalorder %s50, %s51
      %p63 = scmp.eq.s32.totalorder %s20, 3
      %p64 = por %p62, %p63
      %p66 = scmp.ne.s32.totalorder %s51, %s65
      %p67 = scmp.eq.s32.totalorder %s20, 0
      %p68 = por %p66, %p67
      %s70 = sadd.s32 %s69, 1
      %p73 = scmp.eq.s32.totalorder %s14, 3
      %p74 = scmp.ne.s32.totalorder %s69, %s71
      %p75 = scmp.eq.s32.totalorder %s14, 0
      %p76 = por %p74, %p75
      %p77 = scmp.ne.s32.totalorder %s69, %s71
      %p78 = scmp.eq.s32.totalorder %s19, 3
      %p79 = por %p77, %p78
      %p80 = scmp.ne.s32.totalorder %s71, %s72
      %p81 = scmp.eq.s32.totalorder %s19, 0
      %p82 = por %p80, %p81
      %p83 = scmp.ne.s32.totalorder %s71, %s72
      %p84 = scmp.eq.s32.totalorder %s20, 3
      %p85 = por %p83, %p84
      %p87 = scmp.ne.s32.totalorder %s72, %s86
      %p88 = scmp.eq.s32.totalorder %s20, 0
      %p89 = por %p87, %p88
      %p90 = scmp.le.s32.totalorder 1, %s14
      %p91 = scmp.lt.s32.totalorder %s14, 5
      %p92 = pnand %p90, %p91
      %p93 = pneg %p92
      // Predicated region
      $region9: #{tpu_custom_call.1} parent=5 // pred_check
        _
      $region10: #{tpu_custom_call.1} parent=5 // pred_check_branch
        %95 = sbr.rel (%p92) target = $region12
      $region11: #{tpu_custom_call.1} parent=5 // pred_region
        %s96 = ssub.s32 %s14, 1
      $region12: #{tpu_custom_call.1} parent=5 // pred_fallthru
        _
      %p97 = scmp.lt.s32.totalorder %s14, 4
      // Predicated region
      $region13: #{tpu_custom_call.1} parent=5 // pred_check
        %p98 = pneg %p97
      $region14: #{tpu_custom_call.1} parent=5 // pred_check_branch
        %100 = sbr.rel (%p98) target = $region16
      $region15: #{tpu_custom_call.1} parent=5 // pred_region
        // Predicated region
        $region17: #{tpu_custom_call.1} parent=15 // pred_check
          %p101 = pneg %p34
        $region18: #{tpu_custom_call.1} parent=15 // pred_check_branch
          %103 = sbr.rel (%p101) target = $region20
        $region19: #{tpu_custom_call.1} parent=15 // pred_region
          %s104 = sand.u32 %s24, 1
          %s105 = scalar_lea.sflag [#allocation4], %s104
          %s106 = sand.u32 %s24, 1
          %s107 = smul.addr %s106, 16
          %s108 = scalar_lea.vmem [#allocation3], %s107
          %s109 = smul.u32 2, %s14
          %s111 = ssub.s32 256, 256
          %112 = vsyncadd %s105, %s111
          %s113 = smul.addr %s109, 128
          %s114 = scalar_lea.hbm %s0, %s113
          %s115 = sshll.u32 %s108, 4
          %s116 = int_to_ptr.vmem [resolvable:$true] %s115
          %121 = dma.hbm_to_vmem [thread:$0]  %s114, 256, %s116, %s105, 128, 128, 8
        $region20: #{tpu_custom_call.1} parent=15 // pred_fallthru
          _
      $region16: #{tpu_custom_call.1} parent=5 // pred_fallthru
        _
      %p122 = scmp.le.s32.totalorder 1, %s14
      %p123 = scmp.lt.s32.totalorder %s14, 5
      %p124 = pnand %p122, %p123
      %p125 = pneg %p124
      // Predicated region
      $region21: #{tpu_custom_call.1} parent=5 // pred_check
        _
      $region22: #{tpu_custom_call.1} parent=5 // pred_check_branch
        %127 = sbr.rel (%p124) target = $region24
      $region23: #{tpu_custom_call.1} parent=5 // pred_region
        %s128 = ssub.s32 %s14, 1
        %s129 = sand.u32 %s27, 1
        %s130 = scalar_lea.sflag [#allocation4], %s129
        %s131 = sand.u32 %s27, 1
        %s132 = smul.addr %s131, 16
        %s133 = scalar_lea.vmem [#allocation3], %s132
        // Predicated region
        $region25: #{tpu_custom_call.1} parent=23 // pred_check
          %p134 = pneg %p40
        $region26: #{tpu_custom_call.1} parent=23 // pred_check_branch
          %136 = sbr.rel (%p134) target = $region28
        $region27: #{tpu_custom_call.1} parent=23 // pred_region
          %137 = dma.done %s130, 256
        $region28: #{tpu_custom_call.1} parent=23 // pred_fallthru
          _
        %s138 = sand.u32 %s27, 1
        %s139 = scalar_lea.sflag [#allocation4], %s138
        %s140 = sand.u32 %s27, 1
        %s141 = smul.addr %s140, 16
        %s142 = scalar_lea.vmem [#allocation3], %s141
        %p143 = pneg %p40
        %p144 = pneg %p37
        %p145 = pneg %p61
        %p146 = pneg %p58
        %p147 = pneg %p82
        %p148 = pneg %p79
        %s149 = smul.u32 2, %s19
        %p150 = scmp.eq.s32.totalorder %s19, 0
        // Predicated region
        $region29: #{tpu_custom_call.1} parent=23 // pred_check
          %p151 = pneg %p150
        $region30: #{tpu_custom_call.1} parent=23 // pred_check_branch
          %153 = sbr.rel (%p151) target = $region32
        $region31: #{tpu_custom_call.1} parent=23 // pred_region
          %vm154 = vcmask 0
          %155 = vst.msk [vmem:[#allocation6] sm:$0x1] %vm154, 0.0
          %156 = vst.msk [vmem:[#allocation7] sm:$0x1] %vm154, 0.0
          %157 = vst [vmem:[#allocation2] sm:$0x1] 0.0
        $region32: #{tpu_custom_call.1} parent=23 // pred_fallthru
          _
        %v158 = vld [vmem:[%s133] sm:$0xff]
        %v159 = vld [vmem:[%s133 + $0x8] sm:$0xff]
        %162 = vrot.lane.b32.xlu0 %v158, 1
        %v163 = vpop.permute.xlu0 %162
        %164 = vrot.lane.b32.xlu0 %v159, 1
        %v165 = vpop.permute.xlu0 %164
        %v168 = vsub.f32 %v158, %v163
        %v169 = vsub.f32 %v159, %v165
        %v170 = vld [vmem:[#allocation7] sm:$0x1]
        %v171 = vmul.f32 %v168, %v168
        %v172 = vmul.f32 %v169, %v169
        %175 = vrot.lane.b32.xlu0 %v171, 127
        %v176 = vpop.permute.xlu0 %175
        %177 = vrot.lane.b32.xlu0 %v172, 127
        %v178 = vpop.permute.xlu0 %177
        %vm181 = vcmask 1039360
        %v182 = vsel %vm181, %v176, 0.0
        %v183 = vsel %vm181, %v178, 0.0
        %v184 = vadd.f32 %v182, %v183
        %185 = vadd.xlane.f32.xlu0 %v184
        %v186 = vpop.xlane.xlu0 %185
        %v187 = vrot.slane %v186, 4
        %v188 = vadd.f32 %v186, %v187
        %v189 = vrot.slane %v188, 2
        %v190 = vadd.f32 %v188, %v189
        %v191 = vrot.slane %v190, 1
        %v192 = vadd.f32 %v190, %v191
        %s193 = vtos %v192
        %v194 = vstv %s193
        %v195 = vadd.f32 %v170, %v194
        %vm196 = vcmask 0
        %197 = vst.msk [vmem:[#allocation7] sm:$0x1] %vm196, %v195
        %vm198 = vcmask 1040384
        %v199 = vrot.slane %v158, 7
        %v200 = vrot.slane %v159, 7
        %v201 = vsel %vm198, %v199, %v200
        %v204 = vsub.f32 %v158, %v199
        %v205 = vsub.f32 %v159, %v201
        %v206 = vmul.f32 %v204, %v204
        %v207 = vmul.f32 %v205, %v205
        %vm210 = vcmask 1046528
        %v211 = vrot.slane %v206, 1
        %v212 = vrot.slane %v207, 1
        %v213 = vsel %vm210, %v211, %v212
        %v216 = vsel %vm210, %v212, 0.0
        %v217 = vadd.f32 %v213, %v216
        %218 = vadd.xlane.f32.xlu0 %v217
        %v219 = vpop.xlane.xlu0 %218
        %v220 = vrot.slane %v219, 4
        %v221 = vadd.f32 %v219, %v220
        %v222 = vrot.slane %v221, 2
        %v223 = vadd.f32 %v221, %v222
        %v224 = vrot.slane %v223, 1
        %v225 = vadd.f32 %v223, %v224
        %s226 = vtos %v225
        %v227 = vld [vmem:[#allocation2] sm:$0x1]
        %v228 = vsub.f32 %v158, %v227
        %p229 = scmp.gt.s32.totalorder %s19, 0
        %v230 = vmul.f32 %v228, %v228
        %v231 = vsel %vm198, %v230, 0.0
        %232 = vadd.xlane.f32.xlu0 %v231
        %v233 = vpop.xlane.xlu0 %232
        %v234 = vrot.slane %v233, 4
        %v235 = vadd.f32 %v233, %v234
        %v236 = vrot.slane %v235, 2
        %v237 = vadd.f32 %v235, %v236
        %v238 = vrot.slane %v237, 1
        %v239 = vadd.f32 %v237, %v238
        %s240 = vtos %v239
        %s241 = scalar_select %p229, %s240, 0.0
        %v242 = vld [vmem:[#allocation6] sm:$0x1]
        %s243 = sadd.f32 %s226, %s241
        %v244 = vstv %s243
        %v245 = vadd.f32 %v242, %v244
        %246 = vst.msk [vmem:[#allocation6] sm:$0x1] %vm196, %v245
        %247 = vst [vmem:[#allocation2 - $0x7] sm:$0x80] %v159
        // Predicated region
        $region33: #{tpu_custom_call.1} parent=23 // pred_check
          %p248 = pneg %p58
        $region34: #{tpu_custom_call.1} parent=23 // pred_check_branch
          %250 = sbr.rel (%p248) target = $region36
        $region35: #{tpu_custom_call.1} parent=23 // pred_region
          %s252 = ssub.s32 16, 16
          %253 = vsyncadd [#allocation5], %s252
          %s255 = sshll.u32 [#allocation6], 4
          %s256 = int_to_ptr.vmem [resolvable:$true] %s255
          %258 = dma.vmem_to_hbm [thread:$0]  %s256, 16, %s1, [#allocation5]
        $region36: #{tpu_custom_call.1} parent=23 // pred_fallthru
          _
        // Predicated region
        $region37: #{tpu_custom_call.1} parent=23 // pred_check
          %p259 = pneg %p79
        $region38: #{tpu_custom_call.1} parent=23 // pred_check_branch
          %261 = sbr.rel (%p259) target = $region40
        $region39: #{tpu_custom_call.1} parent=23 // pred_region
          %s263 = ssub.s32 16, 16
          %264 = vsyncadd [#allocation8], %s263
          %s266 = sshll.u32 [#allocation7], 4
          %s267 = int_to_ptr.vmem [resolvable:$true] %s266
          %269 = dma.vmem_to_hbm [thread:$0]  %s267, 16, %s2, [#allocation8]
        $region40: #{tpu_custom_call.1} parent=23 // pred_fallthru
          _
        // Predicated region
        $region41: #{tpu_custom_call.1} parent=23 // pred_check
          %p270 = pneg %p58
        $region42: #{tpu_custom_call.1} parent=23 // pred_check_branch
          %272 = sbr.rel (%p270) target = $region44
        $region43: #{tpu_custom_call.1} parent=23 // pred_region
          %273 = dma.done [#allocation5], 16
        $region44: #{tpu_custom_call.1} parent=23 // pred_fallthru
          _
        // Predicated region
        $region45: #{tpu_custom_call.1} parent=23 // pred_check
          %p274 = pneg %p79
        $region46: #{tpu_custom_call.1} parent=23 // pred_check_branch
          %276 = sbr.rel (%p274) target = $region48
        $region47: #{tpu_custom_call.1} parent=23 // pred_region
          %277 = dma.done [#allocation8], 16
        $region48: #{tpu_custom_call.1} parent=23 // pred_fallthru
          _
      $region24: #{tpu_custom_call.1} parent=5 // pred_fallthru
        _
      %p278 = scmp.le.s32.totalorder 2, %s14
      // Predicated region
      $region49: #{tpu_custom_call.1} parent=5 // pred_check
        %p279 = pneg %p278
      $region50: #{tpu_custom_call.1} parent=5 // pred_check_branch
        %281 = sbr.rel (%p279) target = $region52
      $region51: #{tpu_custom_call.1} parent=5 // pred_region
        %s282 = ssub.s32 %s14, 2
      $region52: #{tpu_custom_call.1} parent=5 // pred_fallthru
        _
    $region6: #{tpu_custom_call.1} parent=1 // loop_footer
      %s18 = sadd.s32 1, %s14
    $region7: #{tpu_custom_call.1} parent=1 // loop_footer_branch
      %13 = sbr.rel target = $region3
    $region8: #{tpu_custom_call.1} parent=1 // loop_exit
      _
    %283 = vsyncpa [#allocation4], 1
    %s284 = scalar_lea.sflag [#allocation4], 1
    %285 = vsyncpa %s284, 1
    %286 = vsyncpa [#allocation5], 1
    %s287 = scalar_lea.sflag [#allocation5], 1
    %288 = vsyncpa %s287, 1
    %289 = vsyncpa [#allocation8], 1

</llo_original>
